<compile_context>
chip_gen: v7x
topology: tpu7x:2x2x1
jax: 0.10.0
libtpu: 0.0.40
codegen_flags: <defaults>
</compile_context>

<pallas_src>
import functools
import math

import jax
import jax.numpy as jnp
from jax import lax
from jax.experimental import pallas as pl
from jax.experimental.pallas import tpu as pltpu


# ----------------------------- math helpers -----------------------------

def _layernorm(x, w, b, eps=1e-5):
    mu = jnp.mean(x, axis=-1, keepdims=True)
    var = jnp.mean((x - mu) ** 2, axis=-1, keepdims=True)
    return (x - mu) * lax.rsqrt(var + eps) * w + b


def _erf(x):
    # Abramowitz & Stegun 7.1.26 (abs err ~1.5e-7) — avoids relying on an erf
    # lowering inside Mosaic.
    a1, a2, a3, a4, a5 = 0.254829592, -0.284496736, 1.421413741, -1.453152027, 1.061405429
    p = 0.3275911
    sgn = jnp.where(x >= 0.0, 1.0, -1.0)
    ax = jnp.abs(x)
    t = 1.0 / (1.0 + p * ax)
    poly = ((((a5 * t + a4) * t + a3) * t + a2) * t + a1) * t
    return sgn * (1.0 - poly * jnp.exp(-ax * ax))


def _gelu_exact(x):
    # matches torch.nn.GELU() (erf-based) to fp32 precision
    return 0.5 * x * (1.0 + _erf(x * (1.0 / math.sqrt(2.0))))


def _pick_batch_tile(N, S, cap_rows=2048):
    """Largest divisor of N keeping the flattened (b*S, E) slab modest."""
    best = 1
    for b in range(1, N + 1):
        if N % b == 0 and b * S <= cap_rows:
            best = b
    return best


def _full_spec(shape):
    return pl.BlockSpec(shape, lambda b, n=len(shape): (0,) * n)


# --------------------------- transformer layer kernel ---------------------------

def _gpt_layer_kernel(num_heads,
                      x_ref,
                      ln1w_ref, ln1b_ref,
                      wqkv_ref, bqkv_ref, wo_ref, bo_ref,
                      ln2w_ref, ln2b_ref,
                      w1_ref, b1_ref, w2_ref, b2_ref,
                      o_ref):
    B, S, E = x_ref.shape
    Dh = E // num_heads
    scale = 1.0 / math.sqrt(Dh)

    x3 = x_ref[...]                             # (B, S, E)
    x = x3.reshape(B * S, E)                    # dense slab for projections

    # causal additive mask, generated in-kernel (no HBM traffic)
    row = lax.broadcasted_iota(jnp.int32, (S, S), 0)
    col = lax.broadcasted_iota(jnp.int32, (S, S), 1)
    mask = jnp.where(col <= row, 0.0, -1e30).astype(jnp.float32)

    # --- self-attention block: x + MHA(LN1(x)) ---
    xn = _layernorm(x, ln1w_ref[...], ln1b_ref[...])
    qkv = jnp.dot(xn, wqkv_ref[...], preferred_element_type=jnp.float32) + bqkv_ref[...]
    q = qkv[:, :E].reshape(B, S, E)
    k = qkv[:, E:2 * E].reshape(B, S, E)
    v = qkv[:, 2 * E:].reshape(B, S, E)

    wo = wo_ref[...]
    attn = jnp.zeros((B * S, E), jnp.float32) + bo_ref[...]
    for h in range(num_heads):                  # static unroll; no concat — each
        lo, hi = h * Dh, (h + 1) * Dh           # head folded into Wo slice directly
        qh = q[:, :, lo:hi] * scale             # (B, S, Dh)
        kh = k[:, :, lo:hi]
        vh = v[:, :, lo:hi]
        s = jnp.einsum('bid,bjd->bij', qh, kh,
                       preferred_element_type=jnp.float32) + mask[None]
        s = s - jnp.max(s, axis=-1, keepdims=True)
        p = jnp.exp(s)
        p = p * pl.reciprocal(jnp.sum(p, axis=-1, keepdims=True), approx=True)
        ctx = jnp.einsum('bij,bjd->bid', p, vh,
                         preferred_element_type=jnp.float32)          # (B, S, Dh)
        attn = attn + jnp.dot(ctx.reshape(B * S, Dh), wo[lo:hi, :],
                              preferred_element_type=jnp.float32)
    x = x + attn

    # --- feed-forward block: x + MLP(LN2(x)) ---
    xn2 = _layernorm(x, ln2w_ref[...], ln2b_ref[...])
    h1 = jnp.dot(xn2, w1_ref[...], preferred_element_type=jnp.float32) + b1_ref[...]
    h1 = _gelu_exact(h1)
    ff = jnp.dot(h1, w2_ref[...], preferred_element_type=jnp.float32) + b2_ref[...]
    out = (x + ff).reshape(B, S, E)

    # --- z_fix folded in: sequence row 0 stays fixed to its input value ---
    s_idx = lax.broadcasted_iota(jnp.int32, (B, S, E), 1)
    o_ref[...] = jnp.where(s_idx == 0, x3, out)


def gpt_layer_pallas(x, lp, num_heads, b_tile):
    """x: (N, S, E) -> (N, S, E); grid over batch tiles."""
    N, S, E = x.shape
    FE = lp['w1_t'].shape[1]
    kernel = functools.partial(_gpt_layer_kernel, num_heads)

    return pl.pallas_call(
        kernel,
        out_shape=jax.ShapeDtypeStruct((N, S, E), jnp.float32),
        grid=(N // b_tile,),
        in_specs=[
            pl.BlockSpec((b_tile, S, E), lambda b: (b, 0, 0)),
            _full_spec((1, E)), _full_spec((1, E)),
            _full_spec((E, 3 * E)), _full_spec((1, 3 * E)),
            _full_spec((E, E)), _full_spec((1, E)),
            _full_spec((1, E)), _full_spec((1, E)),
            _full_spec((E, FE)), _full_spec((1, FE)),
            _full_spec((FE, E)), _full_spec((1, E)),
        ],
        out_specs=pl.BlockSpec((b_tile, S, E), lambda b: (b, 0, 0)),
        compiler_params=pltpu.CompilerParams(dimension_semantics=("parallel",)),
    )(x,
      lp['ln1_w'], lp['ln1_b'],
      lp['wqkv_t'], lp['bqkv'],
      lp['wo_t'], lp['bo'],
      lp['ln2_w'], lp['ln2_b'],
      lp['w1_t'], lp['b1'],
      lp['w2_t'], lp['b2'])


# ------------------------------ embedding kernel ------------------------------

def _embed_kernel(zt_ref, zp_ref, tok_ref, pe_ref,
                  zmw_ref, zmb_ref, zew_ref, zeb_ref,
                  wtop_ref, wmid_ref, wbot_ref, smallb_ref,
                  o_ref):
    B, S, E = o_ref.shape

    z_t = zt_ref[...][:, 0, :]                               # (B, Dz)
    z_p = zp_ref[...][:, 0, :]

    z_mem = jnp.dot(z_t, zmw_ref[...], preferred_element_type=jnp.float32) + zmb_ref[...]   # (B, E)
    z_emb = jnp.dot(z_p, zew_ref[...], preferred_element_type=jnp.float32) + zeb_ref[...]   # (B, E)

    # small_hid_emb_layer decomposed row-wise:
    #   embeds = z_emb @ W_top + input_matrix @ W_mid + pos_enc @ W_bot + b
    in_mat = jnp.concatenate([z_mem[:, None, :], tok_ref[...]], axis=1)      # (B, S, E)
    mid = jnp.dot(in_mat.reshape(B * S, E), wmid_ref[...],
                  preferred_element_type=jnp.float32).reshape(B, S, E)
    ztop = jnp.dot(z_emb, wtop_ref[...], preferred_element_type=jnp.float32) + smallb_ref[...]   # (B, E)
    pe_proj = jnp.dot(pe_ref[...], wbot_ref[...], preferred_element_type=jnp.float32)            # (S, E)

    o_ref[...] = mid + ztop[:, None, :] + pe_proj[None, :, :]


def embed_pallas(z_t3, z_p3, tok_emb, pe_s, params, b_tile):
    """Fused deal_z + get_input projection.  Returns embeds (N, S, E)."""
    N, _, Dz = z_t3.shape
    _, S1, E = tok_emb.shape
    S = S1 + 1
    sw = params['small_w']                    # (3E, E), rows = [z_emb | input | pos]
    w_top, w_mid, w_bot = sw[:E], sw[E:2 * E], sw[2 * E:]

    return pl.pallas_call(
        _embed_kernel,
        out_shape=jax.ShapeDtypeStruct((N, S, E), jnp.float32),
        grid=(N // b_tile,),
        in_specs=[
            pl.BlockSpec((b_tile, 1, Dz), lambda b: (b, 0, 0)),
            pl.BlockSpec((b_tile, 1, Dz), lambda b: (b, 0, 0)),
            pl.BlockSpec((b_tile, S1, E), lambda b: (b, 0, 0)),
            _full_spec((S, E)),
            _full_spec((Dz, E)), _full_spec((1, E)),
            _full_spec((Dz, E)), _full_spec((1, E)),
            _full_spec((E, E)), _full_spec((E, E)), _full_spec((E, E)), _full_spec((1, E)),
        ],
        out_specs=pl.BlockSpec((b_tile, S, E), lambda b: (b, 0, 0)),
        compiler_params=pltpu.CompilerParams(dimension_semantics=("parallel",)),
    )(z_t3, z_p3, tok_emb, pe_s,
      params['z_mem_w'], params['z_mem_b'],
      params['z_emb_w'], params['z_emb_b'],
      w_top, w_mid, w_bot, params['small_b'])


# ------------------------------ tiled linear kernel ------------------------------

def _linear_nobias_kernel(x_ref, w_ref, o_ref):
    o_ref[...] = jnp.dot(x_ref[...], w_ref[...], preferred_element_type=jnp.float32)


def pallas_linear_nobias(x2d, w_t, tm=256, tn=512):
    """x2d: (M, K); w_t: (K, Nf). Tiles M/Nf when they divide the targets."""
    M, K = x2d.shape
    Nf = w_t.shape[1]
    tm = tm if (M % tm == 0) else M
    tn = tn if (Nf % tn == 0) else Nf
    return pl.pallas_call(
        _linear_nobias_kernel,
        out_shape=jax.ShapeDtypeStruct((M, Nf), jnp.float32),
        grid=(M // tm, Nf // tn),
        in_specs=[pl.BlockSpec((tm, K), lambda i, j: (i, 0)),
                  pl.BlockSpec((K, tn), lambda i, j: (0, j))],
        out_specs=pl.BlockSpec((tm, tn), lambda i, j: (i, j)),
        compiler_params=pltpu.CompilerParams(
            dimension_semantics=("parallel", "parallel")),
    )(x2d, w_t)


# ------------------------------- parameters -------------------------------

def init_params(key, cfg):
    E = cfg['hid_emb']
    FE = cfg['forward_expansion'] * E
    n_keys = 5 + cfg['num_layers']
    keys = jax.random.split(key, n_keys)

    def w(k, shape, scale=0.1):
        return scale * jax.random.normal(k, shape, dtype=jnp.float32)

    params = {
        'emb_table': w(keys[0], (cfg['n_tokens'], E)),
        'z_mem_w': w(keys[1], (cfg['disper_size'], E)),   # stored transposed (in, out)
        'z_mem_b': jnp.zeros((1, E), jnp.float32),
        'z_emb_w': w(keys[2], (cfg['distil_size'], E)),
        'z_emb_b': jnp.zeros((1, E), jnp.float32),
        'small_w': w(keys[3], (3 * E, E)),
        'small_b': jnp.zeros((1, E), jnp.float32),
        'out_w': w(keys[4], (E, cfg['n_tokens'])),        # output_layer has no bias
    }

    # sinusoidal positional encoding table (PositionalEncoding(hid_emb, ., max_len+10))
    P = cfg['max_len'] + 10
    pos = jnp.arange(P, dtype=jnp.float32)[:, None]
    div = jnp.exp(jnp.arange(0, E, 2, dtype=jnp.float32) * (-math.log(10000.0) / E))
    pe = jnp.zeros((P, E), jnp.float32)
    pe = pe.at[:, 0::2].set(jnp.sin(pos * div))
    pe = pe.at[:, 1::2].set(jnp.cos(pos * div))
    params['pe'] = pe

    layers = []
    for l in range(cfg['num_layers']):
        lk = jax.random.split(keys[5 + l], 4)
        layers.append(dict(
            ln1_w=jnp.ones((1, E), jnp.float32), ln1_b=jnp.zeros((1, E), jnp.float32),
            wqkv_t=w(lk[0], (E, 3 * E)), bqkv=jnp.zeros((1, 3 * E), jnp.float32),
            wo_t=w(lk[1], (E, E)), bo=jnp.zeros((1, E), jnp.float32),
            ln2_w=jnp.ones((1, E), jnp.float32), ln2_b=jnp.zeros((1, E), jnp.float32),
            w1_t=w(lk[2], (E, FE)), b1=jnp.zeros((1, FE), jnp.float32),
            w2_t=w(lk[3], (FE, E)), b2=jnp.zeros((1, E), jnp.float32),
        ))
    params['layers'] = layers
    return params


# ------------------------------- full forward -------------------------------

def gpt_easy_forward(params, inputs, z, cfg):
    """GPT_EASY.forward(inputs, z, pad_mask=None, is_training=True).

    inputs: (N, max_len) int token ids
    z:      (N, 2, distil_size)   (distil_size == disper_size)
    returns (N, max_len, n_tokens)
    """
    E = cfg['hid_emb']
    H = cfg['num_heads']
    L = cfg['num_layers']
    max_len = cfg['max_len']
    n_tokens = cfg['n_tokens']
    bos_idx = cfg['bos_idx']
    N = inputs.shape[0]
    S = max_len                                    # z_len(=1) + (max_len-1) tokens

    b_tile = _pick_batch_tile(N, S)

    # --- deal_z + get_input (EASY: input_idx = inputs[:, :-1]), fully fused ---
    z_t3 = z[:, 0:1, :]                            # (N, 1, Dz)
    z_p3 = z[:, 1:2, :]
    idx = inputs[:, :-1]                           # (N, max_len-1)
    tok_emb = params['emb_table'][idx]             # gather stays in XLA (tiny)
    pe_s = params['pe'][:S]                        # (S, E)
    embeds = embed_pallas(z_t3, z_p3, tok_emb, pe_s, params, b_tile)   # (N, S, E)

    # --- GPT decoder with z_fix=True (row-0 restore folded into each layer) ---
    out = embeds
    for l in range(L):
        out = gpt_layer_pallas(out, params['layers'][l], H, b_tile)

    # --- drop z row, output projection, prepend bos prob ---
    out = out[:, 1:, :]                            # (N, S-1, E)
    logits = pallas_linear_nobias(out.reshape(N * (S - 1), E),
                                  params['out_w']).reshape(N, S - 1, n_tokens)
    bos_prob = jnp.zeros((N, 1, n_tokens), jnp.float32).at[:, :, bos_idx].set(1e8)
    return jnp.concatenate([bos_prob, logits], axis=1)   # (N, max_len, n_tokens)


# ---------------------------------- main ----------------------------------

if __name__ == "__main__":
    cfg = dict(
        hid_emb=32,          # config.emb_size
        num_heads=2,
        num_layers=2,
        forward_expansion=2,
        max_len=8,           # config.seq_len
        n_tokens=16,
        distil_size=8,
        disper_size=8,
        bos_idx=1,
        eos_idx=2,
        mask_idx=3,
    )
    key = jax.random.PRNGKey(0)
    k_param, k_in, k_z = jax.random.split(key, 3)

    params = init_params(k_param, cfg)

    N = 2
    inputs = jax.random.randint(k_in, (N, cfg['max_len']), 0, cfg['n_tokens'],
                                dtype=jnp.int32)
    z = jax.random.normal(k_z, (N, 2, cfg['distil_size']), dtype=jnp.float32)

    out = gpt_easy_forward(params, inputs, z, cfg)
    out = jax.block_until_ready(out)
    assert out.shape == (N, cfg['max_len'], cfg['n_tokens']), out.shape
    assert bool(jnp.all(jnp.isfinite(out)))
    print("KERNEL_OK")
</pallas_src>

<mosaic_0001>
module attributes {stable_mosaic.version = 11 : i64} {
  func.func @_embed_kernel(%arg0: i32, %arg1: memref<2x1x8xf32, #tpu.memory_space<vmem>>, %arg2: memref<2x1x8xf32, #tpu.memory_space<vmem>>, %arg3: memref<2x7x32xf32, #tpu.memory_space<vmem>>, %arg4: memref<8x32xf32, #tpu.memory_space<vmem>>, %arg5: memref<8x32xf32, #tpu.memory_space<vmem>>, %arg6: memref<1x32xf32, #tpu.memory_space<vmem>>, %arg7: memref<8x32xf32, #tpu.memory_space<vmem>>, %arg8: memref<1x32xf32, #tpu.memory_space<vmem>>, %arg9: memref<32x32xf32, #tpu.memory_space<vmem>>, %arg10: memref<32x32xf32, #tpu.memory_space<vmem>>, %arg11: memref<32x32xf32, #tpu.memory_space<vmem>>, %arg12: memref<1x32xf32, #tpu.memory_space<vmem>>, %arg13: memref<2x8x32xf32, #tpu.memory_space<vmem>>) attributes {dimension_semantics = [#tpu.dimension_semantics<parallel>], iteration_bounds = array<i64: 1>, scalar_prefetch = 0 : i64, scratch_operands = 0 : i64, tpu.core_type = #tpu.core_type<tc>, window_params = [{transform_indices = @transform_0, window_bounds = array<i64: 2, 1, 8>}, {transform_indices = @transform_1, window_bounds = array<i64: 2, 1, 8>}, {transform_indices = @transform_2, window_bounds = array<i64: 2, 7, 32>}, {pipeline_mode = #tpu.pipeline_mode<synchronous>, transform_indices = @transform_3, window_bounds = array<i64: 8, 32>}, {pipeline_mode = #tpu.pipeline_mode<synchronous>, transform_indices = @transform_4, window_bounds = array<i64: 8, 32>}, {pipeline_mode = #tpu.pipeline_mode<synchronous>, transform_indices = @transform_5, window_bounds = array<i64: 1, 32>}, {pipeline_mode = #tpu.pipeline_mode<synchronous>, transform_indices = @transform_6, window_bounds = array<i64: 8, 32>}, {pipeline_mode = #tpu.pipeline_mode<synchronous>, transform_indices = @transform_7, window_bounds = array<i64: 1, 32>}, {pipeline_mode = #tpu.pipeline_mode<synchronous>, transform_indices = @transform_8, window_bounds = array<i64: 32, 32>}, {pipeline_mode = #tpu.pipeline_mode<synchronous>, transform_indices = @transform_9, window_bounds = array<i64: 32, 32>}, {pipeline_mode = #tpu.pipeline_mode<synchronous>, transform_indices = @transform_10, window_bounds = array<i64: 32, 32>}, {pipeline_mode = #tpu.pipeline_mode<synchronous>, transform_indices = @transform_11, window_bounds = array<i64: 1, 32>}, {transform_indices = @transform_12, window_bounds = array<i64: 2, 8, 32>}]} {
    %c0 = arith.constant 0 : index
    %c0_0 = arith.constant 0 : index
    %c0_1 = arith.constant 0 : index
    %0 = vector.load %arg1[%c0, %c0_0, %c0_1] : memref<2x1x8xf32, #tpu.memory_space<vmem>>, vector<2x1x8xf32>
    %1 = vector.shape_cast %0 : vector<2x1x8xf32> to vector<2x8xf32>
    %c0_2 = arith.constant 0 : index
    %c0_3 = arith.constant 0 : index
    %c0_4 = arith.constant 0 : index
    %2 = vector.load %arg2[%c0_2, %c0_3, %c0_4] : memref<2x1x8xf32, #tpu.memory_space<vmem>>, vector<2x1x8xf32>
    %3 = vector.shape_cast %2 : vector<2x1x8xf32> to vector<2x8xf32>
    %c0_5 = arith.constant 0 : index
    %c0_6 = arith.constant 0 : index
    %4 = vector.load %arg5[%c0_5, %c0_6] : memref<8x32xf32, #tpu.memory_space<vmem>>, vector<8x32xf32>
    %cst = arith.constant dense<0.000000e+00> : vector<2x32xf32>
    %5 = tpu.matmul %1, %4, %cst {dimension_numbers = #tpu.dot_dimension_numbers<[1], [0], [0], [1], [0, 0, 1, 1], [], []>} : vector<2x8xf32>, vector<8x32xf32>, vector<2x32xf32> -> vector<2x32xf32>
    %c0_7 = arith.constant 0 : index
    %c0_8 = arith.constant 0 : index
    %6 = vector.load %arg6[%c0_7, %c0_8] : memref<1x32xf32, #tpu.memory_space<vmem>>, vector<1x32xf32>
    %7 = vector.broadcast %6 : vector<1x32xf32> to vector<2x32xf32>
    %8 = arith.addf %5, %7 : vector<2x32xf32>
    %c0_9 = arith.constant 0 : index
    %c0_10 = arith.constant 0 : index
    %9 = vector.load %arg7[%c0_9, %c0_10] : memref<8x32xf32, #tpu.memory_space<vmem>>, vector<8x32xf32>
    %cst_11 = arith.constant dense<0.000000e+00> : vector<2x32xf32>
    %10 = tpu.matmul %3, %9, %cst_11 {dimension_numbers = #tpu.dot_dimension_numbers<[1], [0], [0], [1], [0, 0, 1, 1], [], []>} : vector<2x8xf32>, vector<8x32xf32>, vector<2x32xf32> -> vector<2x32xf32>
    %c0_12 = arith.constant 0 : index
    %c0_13 = arith.constant 0 : index
    %11 = vector.load %arg8[%c0_12, %c0_13] : memref<1x32xf32, #tpu.memory_space<vmem>>, vector<1x32xf32>
    %12 = vector.broadcast %11 : vector<1x32xf32> to vector<2x32xf32>
    %13 = arith.addf %10, %12 : vector<2x32xf32>
    %14 = vector.shape_cast %8 : vector<2x32xf32> to vector<2x1x32xf32>
    %c0_14 = arith.constant 0 : index
    %c0_15 = arith.constant 0 : index
    %c0_16 = arith.constant 0 : index
    %15 = vector.load %arg3[%c0_14, %c0_15, %c0_16] : memref<2x7x32xf32, #tpu.memory_space<vmem>>, vector<2x7x32xf32>
    %16 = tpu.concatenate %14, %15 in 1 : vector<2x1x32xf32>, vector<2x7x32xf32> -> vector<2x8x32xf32>
    %17 = vector.shape_cast %16 : vector<2x8x32xf32> to vector<16x32xf32>
    %c0_17 = arith.constant 0 : index
    %c0_18 = arith.constant 0 : index
    %18 = vector.load %arg10[%c0_17, %c0_18] : memref<32x32xf32, #tpu.memory_space<vmem>>, vector<32x32xf32>
    %cst_19 = arith.constant dense<0.000000e+00> : vector<16x32xf32>
    %19 = tpu.matmul %17, %18, %cst_19 {dimension_numbers = #tpu.dot_dimension_numbers<[1], [0], [0], [1], [0, 0, 1, 1], [], []>} : vector<16x32xf32>, vector<32x32xf32>, vector<16x32xf32> -> vector<16x32xf32>
    %20 = vector.shape_cast %19 : vector<16x32xf32> to vector<2x8x32xf32>
    %c0_20 = arith.constant 0 : index
    %c0_21 = arith.constant 0 : index
    %21 = vector.load %arg9[%c0_20, %c0_21] : memref<32x32xf32, #tpu.memory_space<vmem>>, vector<32x32xf32>
    %cst_22 = arith.constant dense<0.000000e+00> : vector<2x32xf32>
    %22 = tpu.matmul %13, %21, %cst_22 {dimension_numbers = #tpu.dot_dimension_numbers<[1], [0], [0], [1], [0, 0, 1, 1], [], []>} : vector<2x32xf32>, vector<32x32xf32>, vector<2x32xf32> -> vector<2x32xf32>
    %c0_23 = arith.constant 0 : index
    %c0_24 = arith.constant 0 : index
    %23 = vector.load %arg12[%c0_23, %c0_24] : memref<1x32xf32, #tpu.memory_space<vmem>>, vector<1x32xf32>
    %24 = vector.broadcast %23 : vector<1x32xf32> to vector<2x32xf32>
    %25 = arith.addf %22, %24 : vector<2x32xf32>
    %c0_25 = arith.constant 0 : index
    %c0_26 = arith.constant 0 : index
    %26 = vector.load %arg4[%c0_25, %c0_26] : memref<8x32xf32, #tpu.memory_space<vmem>>, vector<8x32xf32>
    %c0_27 = arith.constant 0 : index
    %c0_28 = arith.constant 0 : index
    %27 = vector.load %arg11[%c0_27, %c0_28] : memref<32x32xf32, #tpu.memory_space<vmem>>, vector<32x32xf32>
    %cst_29 = arith.constant dense<0.000000e+00> : vector<8x32xf32>
    %28 = tpu.matmul %26, %27, %cst_29 {dimension_numbers = #tpu.dot_dimension_numbers<[1], [0], [0], [1], [0, 0, 1, 1], [], []>} : vector<8x32xf32>, vector<32x32xf32>, vector<8x32xf32> -> vector<8x32xf32>
    %29 = vector.shape_cast %25 : vector<2x32xf32> to vector<2x1x32xf32>
    %30 = vector.broadcast %29 : vector<2x1x32xf32> to vector<2x8x32xf32>
    %31 = arith.addf %20, %30 : vector<2x8x32xf32>
    %32 = vector.shape_cast %28 : vector<8x32xf32> to vector<1x8x32xf32>
    %33 = vector.broadcast %32 : vector<1x8x32xf32> to vector<2x8x32xf32>
    %34 = arith.addf %31, %33 : vector<2x8x32xf32>
    %c0_30 = arith.constant 0 : index
    %c0_31 = arith.constant 0 : index
    %c0_32 = arith.constant 0 : index
    %35 = vector.load %arg13[%c0_30, %c0_31, %c0_32] : memref<2x8x32xf32, #tpu.memory_space<vmem>>, vector<2x8x32xf32>
    tpu.vector_store %arg13[%c0_30, %c0_31, %c0_32], %34 {strides = array<i32>} : memref<2x8x32xf32, #tpu.memory_space<vmem>>, vector<2x8x32xf32>,
    return
  }
  func.func @transform_0(%arg0: i32) -> (i32, i32, i32) {
    %c0_i32 = arith.constant 0 : i32
    %c0_i32_0 = arith.constant 0 : i32
    %c0_i32_1 = arith.constant 0 : i32
    return %arg0, %c0_i32, %c0_i32_0 : i32, i32, i32
  }
  func.func @transform_1(%arg0: i32) -> (i32, i32, i32) {
    %c0_i32 = arith.constant 0 : i32
    %c0_i32_0 = arith.constant 0 : i32
    %c0_i32_1 = arith.constant 0 : i32
    return %arg0, %c0_i32, %c0_i32_0 : i32, i32, i32
  }
  func.func @transform_2(%arg0: i32) -> (i32, i32, i32) {
    %c0_i32 = arith.constant 0 : i32
    %c0_i32_0 = arith.constant 0 : i32
    %c0_i32_1 = arith.constant 0 : i32
    return %arg0, %c0_i32, %c0_i32_0 : i32, i32, i32
  }
  func.func @transform_3(%arg0: i32) -> (i32, i32) {
    %c0_i32 = arith.constant 0 : i32
    %c0_i32_0 = arith.constant 0 : i32
    %c0_i32_1 = arith.constant 0 : i32
    return %c0_i32, %c0_i32_0 : i32, i32
  }
  func.func @transform_4(%arg0: i32) -> (i32, i32) {
    %c0_i32 = arith.constant 0 : i32
    %c0_i32_0 = arith.constant 0 : i32
    %c0_i32_1 = arith.constant 0 : i32
    return %c0_i32, %c0_i32_0 : i32, i32
  }
  func.func @transform_5(%arg0: i32) -> (i32, i32) {
    %c0_i32 = arith.constant 0 : i32
    %c0_i32_0 = arith.constant 0 : i32
    %c0_i32_1 = arith.constant 0 : i32
    return %c0_i32, %c0_i32_0 : i32, i32
  }
  func.func @transform_6(%arg0: i32) -> (i32, i32) {
    %c0_i32 = arith.constant 0 : i32
    %c0_i32_0 = arith.constant 0 : i32
    %c0_i32_1 = arith.constant 0 : i32
    return %c0_i32, %c0_i32_0 : i32, i32
  }
  func.func @transform_7(%arg0: i32) -> (i32, i32) {
    %c0_i32 = arith.constant 0 : i32
    %c0_i32_0 = arith.constant 0 : i32
    %c0_i32_1 = arith.constant 0 : i32
    return %c0_i32, %c0_i32_0 : i32, i32
  }
  func.func @transform_8(%arg0: i32) -> (i32, i32) {
    %c0_i32 = arith.constant 0 : i32
    %c0_i32_0 = arith.constant 0 : i32
    %c0_i32_1 = arith.constant 0 : i32
    return %c0_i32, %c0_i32_0 : i32, i32
  }
  func.func @transform_9(%arg0: i32) -> (i32, i32) {
    %c0_i32 = arith.constant 0 : i32
    %c0_i32_0 = arith.constant 0 : i32
    %c0_i32_1 = arith.constant 0 : i32
    return %c0_i32, %c0_i32_0 : i32, i32
  }
  func.func @transform_10(%arg0: i32) -> (i32, i32) {
    %c0_i32 = arith.constant 0 : i32
    %c0_i32_0 = arith.constant 0 : i32
    %c0_i32_1 = arith.constant 0 : i32
    return %c0_i32, %c0_i32_0 : i32, i32
  }
  func.func @transform_11(%arg0: i32) -> (i32, i32) {
    %c0_i32 = arith.constant 0 : i32
    %c0_i32_0 = arith.constant 0 : i32
    %c0_i32_1 = arith.constant 0 : i32
    return %c0_i32, %c0_i32_0 : i32, i32
  }
  func.func @transform_12(%arg0: i32) -> (i32, i32, i32) {
    %c0_i32 = arith.constant 0 : i32
    %c0_i32_0 = arith.constant 0 : i32
    %c0_i32_1 = arith.constant 0 : i32
    return %arg0, %c0_i32, %c0_i32_0 : i32, i32, i32
  }
}

</mosaic_0001>

<llo_original>
// kernel: tpu_custom_call.1
$region0: #{tpu_custom_call.1}
  #allocation0 [shape = 'u32[]', space=smem, size = 0x4, offset = 0x4, fixed_abs, tag = 'smem constant byte address 0x4 - core index']
  #allocation1 [shape = 'u32[144,128]{1,0:T(1,128)}', space=vmem, size = 0x12000, scoped, tag = 'internal scratch']
  %s0 = inlined_call_operand.hbm [shape: f32[2,1,8], index: 0, kind: input, shape index: {}]
  %s1 = inlined_call_operand.hbm [shape: f32[2,1,8], index: 1, kind: input, shape index: {}]
  %s2 = inlined_call_operand.vmem [shape: f32[2,7,32], index: 2, kind: input, shape index: {}]
  %s3 = inlined_call_operand.hbm [shape: f32[8,32], index: 3, kind: input, shape index: {}]
  %s4 = inlined_call_operand.hbm [shape: f32[8,32], index: 4, kind: input, shape index: {}]
  %s5 = inlined_call_operand.hbm [shape: f32[1,32], index: 5, kind: input, shape index: {}]
  %s6 = inlined_call_operand.hbm [shape: f32[8,32], index: 6, kind: input, shape index: {}]
  %s7 = inlined_call_operand.hbm [shape: f32[1,32], index: 7, kind: input, shape index: {}]
  %s8 = inlined_call_operand.vmem [shape: f32[32,32], index: 8, kind: input, shape index: {}]
  %s9 = inlined_call_operand.vmem [shape: f32[32,32], index: 9, kind: input, shape index: {}]
  %s10 = inlined_call_operand.hbm [shape: f32[32,32], index: 10, kind: input, shape index: {}]
  %s11 = inlined_call_operand.vmem [shape: f32[1,32], index: 11, kind: input, shape index: {}]
  %s12 = inlined_call_operand.hbm [shape: f32[2,8,32], index: 12, kind: output, shape index: {}]
  %s13 = sld [smem:[#allocation0]]
  $region90: #{tpu_custom_call.1} parent=0
    _
  %s15 = ssub.s32 1, %s13
  %s16 = scalar_select 0, %s15, %s13
  $region1: #{tpu_custom_call.1} parent=0
    #allocation2 [shape = 'u8[1024]{0}', space=vmem, size = 0x400, scoped, tag = 'input window, operand 0, single buffered']
    #allocation3 [shape = 's32[1]{0}', space=sflag, size = 0x4, scoped, tag = 'scoped memory for tpu_custom_call.1']
    #allocation4 [shape = 's32[1]{0}', space=sflag, size = 0x4, scoped, tag = 'scoped memory for tpu_custom_call.1']
    #allocation5 [shape = 'u8[1024]{0}', space=vmem, size = 0x400, scoped, tag = 'input window, operand 1, single buffered']
    #allocation6 [shape = 's32[1]{0}', space=sflag, size = 0x4, scoped, tag = 'scoped memory for tpu_custom_call.1']
    #allocation7 [shape = 'u8[4096]{0}', space=vmem, size = 0x1000, scoped, tag = 'input window, operand 3, single buffered']
    #allocation8 [shape = 'u8[4096]{0}', space=vmem, size = 0x1000, scoped, tag = 'input window, operand 4, single buffered']
    #allocation9 [shape = 's32[1]{0}', space=sflag, size = 0x4, scoped, tag = 'scoped memory for tpu_custom_call.1']
    #allocation10 [shape = 'u8[512]{0}', space=vmem, size = 0x400, scoped, tag = 'input window, operand 5, single buffered']
    #allocation11 [shape = 'u8[4096]{0}', space=vmem, size = 0x1000, scoped, tag = 'input window, operand 6, single buffered']
    #allocation12 [shape = 's32[1]{0}', space=sflag, size = 0x4, scoped, tag = 'scoped memory for tpu_custom_call.1']
    #allocation13 [shape = 'u8[512]{0}', space=vmem, size = 0x400, scoped, tag = 'input window, operand 7, single buffered']
    #allocation14 [shape = 'u8[16384]{0}', space=vmem, size = 0x4000, scoped, tag = 'input window, operand 10, single buffered']
    #allocation15 [shape = 's32[1]{0}', space=sflag, size = 0x4, scoped, tag = 'scoped memory for tpu_custom_call.1']
    #allocation16 [shape = 'u8[8192]{0}', space=vmem, size = 0x2000, scoped, tag = 'output window, operand 0, single buffered']
    %17 = vsyncpa [#allocation3], 0
    %18 = vsyncpa [#allocation6], 0
    %19 = vsyncpa [#allocation9], 0
    %20 = vsyncpa [#allocation12], 0
    %21 = vsyncpa [#allocation15], 0
    %22 = vsyncpa [#allocation4], 0
    // Predicated region
    $region2: #{tpu_custom_call.1} parent=1 // pred_check
      _
    $region3: #{tpu_custom_call.1} parent=1 // pred_check_branch
      %24 = sbr.rel (0) target = $region5
    $region4: #{tpu_custom_call.1} parent=1 // pred_region
      %s26 = ssub.s32 32, 32
      %27 = vsyncadd [#allocation3], %s26
      %s28 = sshll.u32 [#allocation2], 4
      %s29 = int_to_ptr.vmem [resolvable:$true] %s28
      %34 = dma.hbm_to_vmem [thread:$0]  %s0, 32, %s29, [#allocation3], 16, 16, 1
    $region5: #{tpu_custom_call.1} parent=1 // pred_fallthru
      _
    // Predicated region
    $region6: #{tpu_custom_call.1} parent=1 // pred_check
      _
    $region7: #{tpu_custom_call.1} parent=1 // pred_check_branch
      %36 = sbr.rel (0) target = $region9
    $region8: #{tpu_custom_call.1} parent=1 // pred_region
      %s38 = ssub.s32 32, 32
      %39 = vsyncadd [#allocation6], %s38
      %s40 = sshll.u32 [#allocation5], 4
      %s41 = int_to_ptr.vmem [resolvable:$true] %s40
      %46 = dma.hbm_to_vmem [thread:$0]  %s1, 32, %s41, [#allocation6], 16, 16, 1
    $region9: #{tpu_custom_call.1} parent=1 // pred_fallthru
      _
    // Predicated region
    $region10: #{tpu_custom_call.1} parent=1 // pred_check
      _
    $region11: #{tpu_custom_call.1} parent=1 // pred_check_branch
      %48 = sbr.rel (0) target = $region13
    $region12: #{tpu_custom_call.1} parent=1 // pred_region
      _
    $region13: #{tpu_custom_call.1} parent=1 // pred_fallthru
      _
    // Predicated region
    $region14: #{tpu_custom_call.1} parent=1 // pred_check
      _
    $region15: #{tpu_custom_call.1} parent=1 // pred_check_branch
      %50 = sbr.rel (0) target = $region17
    $region16: #{tpu_custom_call.1} parent=1 // pred_region
      %s52 = ssub.s32 128, 128
      %53 = vsyncadd [#allocation6], %s52
      %s55 = sshll.u32 [#allocation7], 4
      %s56 = int_to_ptr.vmem [resolvable:$true] %s55
      %58 = dma.hbm_to_vmem [thread:$0]  %s3, 128, %s56, [#allocation6]
    $region17: #{tpu_custom_call.1} parent=1 // pred_fallthru
      _
    // Predicated region
    $region18: #{tpu_custom_call.1} parent=1 // pred_check
      _
    $region19: #{tpu_custom_call.1} parent=1 // pred_check_branch
      %60 = sbr.rel (0) target = $region21
    $region20: #{tpu_custom_call.1} parent=1 // pred_region
      %s62 = ssub.s32 128, 128
      %63 = vsyncadd [#allocation9], %s62
      %s65 = sshll.u32 [#allocation8], 4
      %s66 = int_to_ptr.vmem [resolvable:$true] %s65
      %68 = dma.hbm_to_vmem [thread:$0]  %s4, 128, %s66, [#allocation9]
    $region21: #{tpu_custom_call.1} parent=1 // pred_fallthru
      _
    // Predicated region
    $region22: #{tpu_custom_call.1} parent=1 // pred_check
      _
    $region23: #{tpu_custom_call.1} parent=1 // pred_check_branch
      %70 = sbr.rel (0) target = $region25
    $region24: #{tpu_custom_call.1} parent=1 // pred_region
      %s72 = ssub.s32 16, 16
      %73 = vsyncadd [#allocation9], %s72
      %s75 = sshll.u32 [#allocation10], 4
      %s76 = int_to_ptr.vmem [resolvable:$true] %s75
      %78 = dma.hbm_to_vmem [thread:$0]  %s5, 16, %s76, [#allocation9]
    $region25: #{tpu_custom_call.1} parent=1 // pred_fallthru
      _
    // Predicated region
    $region26: #{tpu_custom_call.1} parent=1 // pred_check
      _
    $region27: #{tpu_custom_call.1} parent=1 // pred_check_branch
      %80 = sbr.rel (0) target = $region29
    $region28: #{tpu_custom_call.1} parent=1 // pred_region
      %s82 = ssub.s32 128, 128
      %83 = vsyncadd [#allocation12], %s82
      %s85 = sshll.u32 [#allocation11], 4
      %s86 = int_to_ptr.vmem [resolvable:$true] %s85
      %88 = dma.hbm_to_vmem [thread:$0]  %s6, 128, %s86, [#allocation12]
    $region29: #{tpu_custom_call.1} parent=1 // pred_fallthru
      _
    // Predicated region
    $region30: #{tpu_custom_call.1} parent=1 // pred_check
      _
    $region31: #{tpu_custom_call.1} parent=1 // pred_check_branch
      %90 = sbr.rel (0) target = $region33
    $region32: #{tpu_custom_call.1} parent=1 // pred_region
      %s92 = ssub.s32 16, 16
      %93 = vsyncadd [#allocation12], %s92
      %s95 = sshll.u32 [#allocation13], 4
      %s96 = int_to_ptr.vmem [resolvable:$true] %s95
      %98 = dma.hbm_to_vmem [thread:$0]  %s7, 16, %s96, [#allocation12]
    $region33: #{tpu_custom_call.1} parent=1 // pred_fallthru
      _
    // Predicated region
    $region34: #{tpu_custom_call.1} parent=1 // pred_check
      _
    $region35: #{tpu_custom_call.1} parent=1 // pred_check_branch
      %100 = sbr.rel (0) target = $region37
    $region36: #{tpu_custom_call.1} parent=1 // pred_region
      _
    $region37: #{tpu_custom_call.1} parent=1 // pred_fallthru
      _
    // Predicated region
    $region38: #{tpu_custom_call.1} parent=1 // pred_check
      _
    $region39: #{tpu_custom_call.1} parent=1 // pred_check_branch
      %102 = sbr.rel (0) target = $region41
    $region40: #{tpu_custom_call.1} parent=1 // pred_region
      _
    $region41: #{tpu_custom_call.1} parent=1 // pred_fallthru
      _
    // Predicated region
    $region42: #{tpu_custom_call.1} parent=1 // pred_check
      _
    $region43: #{tpu_custom_call.1} parent=1 // pred_check_branch
      %104 = sbr.rel (0) target = $region45
    $region44: #{tpu_custom_call.1} parent=1 // pred_region
      %s106 = ssub.s32 512, 512
      %107 = vsyncadd [#allocation15], %s106
      %s108 = sshll.u32 [#allocation14], 4
      %s109 = int_to_ptr.vmem [resolvable:$true] %s108
      %114 = dma.hbm_to_vmem [thread:$0]  %s10, 512, %s109, [#allocation15], 128, 128, 8
    $region45: #{tpu_custom_call.1} parent=1 // pred_fallthru
      _
    // Predicated region
    $region46: #{tpu_custom_call.1} parent=1 // pred_check
      _
    $region47: #{tpu_custom_call.1} parent=1 // pred_check_branch
      %116 = sbr.rel (0) target = $region49
    $region48: #{tpu_custom_call.1} parent=1 // pred_region
      _
    $region49: #{tpu_custom_call.1} parent=1 // pred_fallthru
      _
    // Predicated region
    $region50: #{tpu_custom_call.1} parent=1 // pred_check
      _
    $region51: #{tpu_custom_call.1} parent=1 // pred_check_branch
      %118 = sbr.rel (0) target = $region53
    $region52: #{tpu_custom_call.1} parent=1 // pred_region
      %119 = dma.done [#allocation3], 32
    $region53: #{tpu_custom_call.1} parent=1 // pred_fallthru
      _
    // Predicated region
    $region54: #{tpu_custom_call.1} parent=1 // pred_check
      _
    $region55: #{tpu_custom_call.1} parent=1 // pred_check_branch
      %121 = sbr.rel (0) target = $region57
    $region56: #{tpu_custom_call.1} parent=1 // pred_region
      %122 = dma.done [#allocation6], 32
    $region57: #{tpu_custom_call.1} parent=1 // pred_fallthru
      _
    // Predicated region
    $region58: #{tpu_custom_call.1} parent=1 // pred_check
      _
    $region59: #{tpu_custom_call.1} parent=1 // pred_check_branch
      %124 = sbr.rel (0) target = $region61
    $region60: #{tpu_custom_call.1} parent=1 // pred_region
      %125 = dma.done [#allocation6], 128
    $region61: #{tpu_custom_call.1} parent=1 // pred_fallthru
      _
    // Predicated region
    $region62: #{tpu_custom_call.1} parent=1 // pred_check
      _
    $region63: #{tpu_custom_call.1} parent=1 // pred_check_branch
      %127 = sbr.rel (0) target = $region65
    $region64: #{tpu_custom_call.1} parent=1 // pred_region
      %128 = dma.done [#allocation9], 128
    $region65: #{tpu_custom_call.1} parent=1 // pred_fallthru
      _
    // Predicated region
    $region66: #{tpu_custom_call.1} parent=1 // pred_check
      _
    $region67: #{tpu_custom_call.1} parent=1 // pred_check_branch
      %130 = sbr.rel (0) target = $region69
    $region68: #{tpu_custom_call.1} parent=1 // pred_region
      %131 = dma.done [#allocation9], 16
    $region69: #{tpu_custom_call.1} parent=1 // pred_fallthru
      _
    // Predicated region
    $region70: #{tpu_custom_call.1} parent=1 // pred_check
      _
    $region71: #{tpu_custom_call.1} parent=1 // pred_check_branch
      %133 = sbr.rel (0) target = $region73
    $region72: #{tpu_custom_call.1} parent=1 // pred_region
      %134 = dma.done [#allocation12], 128
    $region73: #{tpu_custom_call.1} parent=1 // pred_fallthru
      _
    // Predicated region
    $region74: #{tpu_custom_call.1} parent=1 // pred_check
      _
    $region75: #{tpu_custom_call.1} parent=1 // pred_check_branch
      %136 = sbr.rel (0) target = $region77
    $region76: #{tpu_custom_call.1} parent=1 // pred_region
      %137 = dma.done [#allocation12], 16
    $region77: #{tpu_custom_call.1} parent=1 // pred_fallthru
      _
    // Predicated region
    $region78: #{tpu_custom_call.1} parent=1 // pred_check
      _
    $region79: #{tpu_custom_call.1} parent=1 // pred_check_branch
      %139 = sbr.rel (0) target = $region81
    $region80: #{tpu_custom_call.1} parent=1 // pred_region
      %140 = dma.done [#allocation15], 512
    $region81: #{tpu_custom_call.1} parent=1 // pred_fallthru
      _
    %v141 = vld [vmem:[#allocation2] sm:$0x1]
    %v142 = vld [vmem:[#allocation2 + $0x1] sm:$0x1]
    %v143 = vld [vmem:[#allocation5] sm:$0x1]
    %v144 = vld [vmem:[#allocation5 + $0x1] sm:$0x1]
    %v145 = vld [vmem:[#allocation8] sm:$0xff]
    %v146 = vld [vmem:[#allocation10] sm:$0x1]
    %v148 = vlaneseq
    %v149 = vshrl.u32 %v148, 7
    %v150 = vsub.s32 0, %v149
    %v151 = vrot.slane %v146, %v150
    %v155 = vcombine.low %v141, %v142
    %v157 = vunpack.c.l.s4 1966171168
    %v158 = vunpack.c.0.s8 %v157
    %v159 = vlaneseq
    %v160 = vshrl.u32 %v159, 7
    %v161 = vsub.s32 %v158, %v160
    %v162 = vrot.slane %v155, %v161
    %v164 = vunpack.c.l.s4 1966171168
    %v165 = vunpack.c.0.s8 %v164
    %v166 = vlaneseq
    %v167 = vshrl.u32 %v166, 7
    %v168 = vsub.s32 %v165, %v167
    %v169 = vrot.slane %v162, %v168
    %vm170 = vcmask 64512
    %v171 = vsel %vm170, %v169, 0
    %173 = vmatprep.subr.mxu0 0.0
    %174 = vmatpush1.msra.mxu0 %v145
    %175 = vmatprep.subr.mxu0 0.0
    %176 = vmatpush1.msra.mxu0 0.0
    %177 = vmatprep.subr.mxu0 0.0
    %178 = vmatpush1.msra.mxu0 0.0
    %179 = vmatprep.subr.mxu0 0.0
    %180 = vmatpush1.msra.mxu0 0.0
    %181 = vmatprep.subr.mxu0 0.0
    %182 = vmatpush1.msra.mxu0 0.0
    %183 = vmatprep.subr.mxu0 0.0
    %184 = vmatpush1.msra.mxu0 0.0
    %185 = vmatprep.subr.mxu0 0.0
    %186 = vmatpush1.msra.mxu0 0.0
    %187 = vmatprep.subr.mxu0 0.0
    %188 = vmatpush1.msra.mxu0 0.0
    %189 = vmatprep.subr.mxu0 0.0
    %190 = vmatpush1.msra.mxu0 0.0
    %191 = vmatprep.subr.mxu0 0.0
    %192 = vmatpush1.msra.mxu0 0.0
    %193 = vmatprep.subr.mxu0 0.0
    %194 = vmatpush1.msra.mxu0 0.0
    %195 = vmatprep.subr.mxu0 0.0
    %196 = vmatpush1.msra.mxu0 0.0
    %197 = vmatprep.subr.mxu0 0.0
    %198 = vmatpush1.msra.mxu0 0.0
    %199 = vmatprep.subr.mxu0 0.0
    %200 = vmatpush1.msra.mxu0 0.0
    %201 = vmatprep.subr.mxu0 0.0
    %202 = vmatpush1.msra.mxu0 0.0
    %203 = vmatprep.subr.mxu0 0.0
    %204 = vmatpush1.msra.mxu0 0.0
    %205 = vmatprep.subr.mxu0 0.0
    %206 = vmatpush1.msra.mxu0 0.0
    %207 = vmatprep.subr.mxu0 0.0
    %208 = vmatpush1.msra.mxu0 0.0
    %209 = vmatprep.subr.mxu0 0.0
    %210 = vmatpush1.msra.mxu0 0.0
    %211 = vmatprep.subr.mxu0 0.0
    %212 = vmatpush1.msra.mxu0 0.0
    %213 = vmatprep.subr.mxu0 0.0
    %214 = vmatpush1.msra.mxu0 0.0
    %215 = vmatprep.subr.mxu0 0.0
    %216 = vmatpush1.msra.mxu0 0.0
    %217 = vmatprep.subr.mxu0 0.0
    %218 = vmatpush1.msra.mxu0 0.0
    %219 = vmatprep.subr.mxu0 0.0
    %220 = vmatpush1.msra.mxu0 0.0
    %221 = vmatprep.subr.mxu0 0.0
    %222 = vmatpush1.msra.mxu0 0.0
    %223 = vmatprep.subr.mxu0 0.0
    %224 = vmatpush1.msra.mxu0 0.0
    %225 = vmatprep.subr.mxu0 0.0
    %226 = vmatpush1.msra.mxu0 0.0
    %227 = vmatprep.subr.mxu0 0.0
    %228 = vmatpush1.msra.mxu0 0.0
    %229 = vmatprep.subr.mxu0 0.0
    %230 = vmatpush1.msra.mxu0 0.0
    %231 = vmatprep.subr.mxu0 0.0
    %232 = vmatpush1.msra.mxu0 0.0
    %233 = vmatprep.subr.mxu0 0.0
    %234 = vmatpush1.msra.mxu0 0.0
    %235 = vmatprep.subr.mxu0 0.0
    %236 = vmatpush1.msra.mxu0 0.0
    %237 = vmatprep.mubr.f32.mxu0 0.0
    %238 = vmatmul.mubr.f32.gmra.mrb[0].mxu0 %v171
    %v239 = vpop.f32.mrb[0].mxu0
    %v240 = vadd.f32 %v151, %v239
    %v241 = vpop.f32.mrb[0].mxu0
    %242 = vdwg.mxu0
    %v243 = vld [vmem:[#allocation11] sm:$0xff]
    %v244 = vld [vmem:[#allocation13] sm:$0x1]
    %v246 = vlaneseq
    %v247 = vshrl.u32 %v246, 7
    %v248 = vsub.s32 0, %v247
    %v249 = vrot.slane %v244, %v248
    %v253 = vcombine.low %v143, %v144
    %v255 = vunpack.c.l.s4 1966171168
    %v256 = vunpack.c.0.s8 %v255
    %v257 = vlaneseq
    %v258 = vshrl.u32 %v257, 7
    %v259 = vsub.s32 %v256, %v258
    %v260 = vrot.slane %v253, %v259
    %v262 = vunpack.c.l.s4 1966171168
    %v263 = vunpack.c.0.s8 %v262
    %v264 = vlaneseq
    %v265 = vshrl.u32 %v264, 7
    %v266 = vsub.s32 %v263, %v265
    %v267 = vrot.slane %v260, %v266
    %v268 = vsel %vm170, %v267, 0
    %270 = vmatprep.subr.mxu0 0.0
    %271 = vmatpush1.msra.mxu0 %v243
    %272 = vmatprep.subr.mxu0 0.0
    %273 = vmatpush1.msra.mxu0 0.0
    %274 = vmatprep.subr.mxu0 0.0
    %275 = vmatpush1.msra.mxu0 0.0
    %276 = vmatprep.subr.mxu0 0.0
    %277 = vmatpush1.msra.mxu0 0.0
    %278 = vmatprep.subr.mxu0 0.0
    %279 = vmatpush1.msra.mxu0 0.0
    %280 = vmatprep.subr.mxu0 0.0
    %281 = vmatpush1.msra.mxu0 0.0
    %282 = vmatprep.subr.mxu0 0.0
    %283 = vmatpush1.msra.mxu0 0.0
    %284 = vmatprep.subr.mxu0 0.0
    %285 = vmatpush1.msra.mxu0 0.0
    %286 = vmatprep.subr.mxu0 0.0
    %287 = vmatpush1.msra.mxu0 0.0
    %288 = vmatprep.subr.mxu0 0.0
    %289 = vmatpush1.msra.mxu0 0.0
    %290 = vmatprep.subr.mxu0 0.0
    %291 = vmatpush1.msra.mxu0 0.0
    %292 = vmatprep.subr.mxu0 0.0
    %293 = vmatpush1.msra.mxu0 0.0
    %294 = vmatprep.subr.mxu0 0.0
    %295 = vmatpush1.msra.mxu0 0.0
    %296 = vmatprep.subr.mxu0 0.0
    %297 = vmatpush1.msra.mxu0 0.0
    %298 = vmatprep.subr.mxu0 0.0
    %299 = vmatpush1.msra.mxu0 0.0
    %300 = vmatprep.subr.mxu0 0.0
    %301 = vmatpush1.msra.mxu0 0.0
    %302 = vmatprep.subr.mxu0 0.0
    %303 = vmatpush1.msra.mxu0 0.0
    %304 = vmatprep.subr.mxu0 0.0
    %305 = vmatpush1.msra.mxu0 0.0
    %306 = vmatprep.subr.mxu0 0.0
    %307 = vmatpush1.msra.mxu0 0.0
    %308 = vmatprep.subr.mxu0 0.0
    %309 = vmatpush1.msra.mxu0 0.0
    %310 = vmatprep.subr.mxu0 0.0
    %311 = vmatpush1.msra.mxu0 0.0
    %312 = vmatprep.subr.mxu0 0.0
    %313 = vmatpush1.msra.mxu0 0.0
    %314 = vmatprep.subr.mxu0 0.0
    %315 = vmatpush1.msra.mxu0 0.0
    %316 = vmatprep.subr.mxu0 0.0
    %317 = vmatpush1.msra.mxu0 0.0
    %318 = vmatprep.subr.mxu0 0.0
    %319 = vmatpush1.msra.mxu0 0.0
    %320 = vmatprep.subr.mxu0 0.0
    %321 = vmatpush1.msra.mxu0 0.0
    %322 = vmatprep.subr.mxu0 0.0
    %323 = vmatpush1.msra.mxu0 0.0
    %324 = vmatprep.subr.mxu0 0.0
    %325 = vmatpush1.msra.mxu0 0.0
    %326 = vmatprep.subr.mxu0 0.0
    %327 = vmatpush1.msra.mxu0 0.0
    %328 = vmatprep.subr.mxu0 0.0
    %329 = vmatpush1.msra.mxu0 0.0
    %330 = vmatprep.subr.mxu0 0.0
    %331 = vmatpush1.msra.mxu0 0.0
    %332 = vmatprep.subr.mxu0 0.0
    %333 = vmatpush1.msra.mxu0 0.0
    %334 = vmatprep.mubr.f32.mxu0 0.0
    %335 = vmatmul.mubr.f32.gmra.mrb[0].mxu0 %v268
    %v336 = vpop.f32.mrb[0].mxu0
    %v337 = vadd.f32 %v249, %v336
    %v338 = vpop.f32.mrb[0].mxu0
    %339 = vdwg.mxu0
    %v342 = vunpack.c.l.s4 1966171168
    %v343 = vunpack.c.0.s8 %v342
    %v344 = vlaneseq
    %v345 = vshrl.u32 %v344, 7
    %v346 = vsub.s32 %v343, %v345
    %v347 = vrot.slane %v240, %v346
    %v348 = vcombine.high %v347, %v347
    %v350 = vunpack.c.l.s4 1966171168
    %v351 = vunpack.c.0.s8 %v350
    %v352 = vlaneseq
    %v353 = vshrl.u32 %v352, 7
    %v354 = vsub.s32 %v351, %v353
    %v355 = vrot.slane %v347, %v354
    %v357 = vunpack.c.l.s4 1966171168
    %v358 = vunpack.c.0.s8 %v357
    %v359 = vlaneseq
    %v360 = vshrl.u32 %v359, 7
    %v361 = vsub.s32 %v358, %v360
    %v362 = vrot.slane %v348, %v361
    %v365 = vld [vmem:[%s2] sm:$0x7f]
    %v366 = vld [vmem:[%s2 + $0x8] sm:$0x7f]
    %v369 = vrot.slane %v365, 7
    %v370 = vrot.slane %v366, 7
    %vm373 = vcmask 1040384
    %v374 = vsel %vm373, %v355, %v369
    %v375 = vsel %vm373, %v362, %v370
    %v376 = vld [vmem:[%s9] sm:$0xff]
    %v377 = vld [vmem:[%s9 + $0x8] sm:$0xff]
    %v378 = vld [vmem:[%s9 + $0x10] sm:$0xff]
    %v379 = vld [vmem:[%s9 + $0x18] sm:$0xff]
    %vm380 = vcmask 261120
    %v382 = vsel %vm380, %v374, 0
    %v385 = vsel %vm380, %v375, 0
    %387 = vmatprep.subr.mxu0 0.0
    %388 = vmatpush1.msra.mxu0 %v376
    %389 = vmatprep.subr.mxu0 0.0
    %390 = vmatpush1.msra.mxu0 %v377
    %391 = vmatprep.subr.mxu0 0.0
    %392 = vmatpush1.msra.mxu0 %v378
    %393 = vmatprep.subr.mxu0 0.0
    %394 = vmatpush1.msra.mxu0 %v379
    %395 = vmatprep.subr.mxu0 0.0
    %396 = vmatpush1.msra.mxu0 0.0
    %397 = vmatprep.subr.mxu0 0.0
    %398 = vmatpush1.msra.mxu0 0.0
    %399 = vmatprep.subr.mxu0 0.0
    %400 = vmatpush1.msra.mxu0 0.0
    %401 = vmatprep.subr.mxu0 0.0
    %402 = vmatpush1.msra.mxu0 0.0
    %403 = vmatprep.subr.mxu0 0.0
    %404 = vmatpush1.msra.mxu0 0.0
    %405 = vmatprep.subr.mxu0 0.0
    %406 = vmatpush1.msra.mxu0 0.0
    %407 = vmatprep.subr.mxu0 0.0
    %408 = vmatpush1.msra.mxu0 0.0
    %409 = vmatprep.subr.mxu0 0.0
    %410 = vmatpush1.msra.mxu0 0.0
    %411 = vmatprep.subr.mxu0 0.0
    %412 = vmatpush1.msra.mxu0 0.0
    %413 = vmatprep.subr.mxu0 0.0
    %414 = vmatpush1.msra.mxu0 0.0
    %415 = vmatprep.subr.mxu0 0.0
    %416 = vmatpush1.msra.mxu0 0.0
    %417 = vmatprep.subr.mxu0 0.0
    %418 = vmatpush1.msra.mxu0 0.0
    %419 = vmatprep.subr.mxu0 0.0
    %420 = vmatpush1.msra.mxu0 0.0
    %421 = vmatprep.subr.mxu0 0.0
    %422 = vmatpush1.msra.mxu0 0.0
    %423 = vmatprep.subr.mxu0 0.0
    %424 = vmatpush1.msra.mxu0 0.0
    %425 = vmatprep.subr.mxu0 0.0
    %426 = vmatpush1.msra.mxu0 0.0
    %427 = vmatprep.subr.mxu0 0.0
    %428 = vmatpush1.msra.mxu0 0.0
    %429 = vmatprep.subr.mxu0 0.0
    %430 = vmatpush1.msra.mxu0 0.0
    %431 = vmatprep.subr.mxu0 0.0
    %432 = vmatpush1.msra.mxu0 0.0
    %433 = vmatprep.subr.mxu0 0.0
    %434 = vmatpush1.msra.mxu0 0.0
    %435 = vmatprep.subr.mxu0 0.0
    %436 = vmatpush1.msra.mxu0 0.0
    %437 = vmatprep.subr.mxu0 0.0
    %438 = vmatpush1.msra.mxu0 0.0
    %439 = vmatprep.subr.mxu0 0.0
    %440 = vmatpush1.msra.mxu0 0.0
    %441 = vmatprep.subr.mxu0 0.0
    %442 = vmatpush1.msra.mxu0 0.0
    %443 = vmatprep.subr.mxu0 0.0
    %444 = vmatpush1.msra.mxu0 0.0
    %445 = vmatprep.subr.mxu0 0.0
    %446 = vmatpush1.msra.mxu0 0.0
    %447 = vmatprep.subr.mxu0 0.0
    %448 = vmatpush1.msra.mxu0 0.0
    %449 = vmatprep.subr.mxu0 0.0
    %450 = vmatpush1.msra.mxu0 0.0
    %451 = vmatprep.mubr.f32.mxu0 0.0
    %452 = vmatmul.mubr.f32.gmra.mrb[0].mxu0 %v382
    %v453 = vpop.f32.mrb[0].mxu0
    %v454 = vadd.f32 0.0, %v453
    %v455 = vpop.f32.mrb[0].mxu0
    %456 = vmatprep.mubr.f32.mxu0 0.0
    %457 = vmatmul.mubr.f32.gmra.mrb[0].mxu0 %v385
    %v458 = vpop.f32.mrb[0].mxu0
    %v459 = vadd.f32 0.0, %v458
    %v460 = vpop.f32.mrb[0].mxu0
    %461 = vdwg.mxu0
    %v462 = vld [vmem:[%s8] sm:$0xff]
    %v463 = vld [vmem:[%s8 + $0x8] sm:$0xff]
    %v464 = vld [vmem:[%s8 + $0x10] sm:$0xff]
    %v465 = vld [vmem:[%s8 + $0x18] sm:$0xff]
    %v466 = vld [vmem:[%s11] sm:$0x1]
    %v468 = vlaneseq
    %v469 = vshrl.u32 %v468, 7
    %v470 = vsub.s32 0, %v469
    %v471 = vrot.slane %v466, %v470
    %v474 = vsel %vm380, %v337, 0
    %476 = vmatprep.subr.mxu0 0.0
    %477 = vmatpush1.msra.mxu0 %v462
    %478 = vmatprep.subr.mxu0 0.0
    %479 = vmatpush1.msra.mxu0 %v463
    %480 = vmatprep.subr.mxu0 0.0
    %481 = vmatpush1.msra.mxu0 %v464
    %482 = vmatprep.subr.mxu0 0.0
    %483 = vmatpush1.msra.mxu0 %v465
    %484 = vmatprep.subr.mxu0 0.0
    %485 = vmatpush1.msra.mxu0 0.0
    %486 = vmatprep.subr.mxu0 0.0
    %487 = vmatpush1.msra.mxu0 0.0
    %488 = vmatprep.subr.mxu0 0.0
    %489 = vmatpush1.msra.mxu0 0.0
    %490 = vmatprep.subr.mxu0 0.0
    %491 = vmatpush1.msra.mxu0 0.0
    %492 = vmatprep.subr.mxu0 0.0
    %493 = vmatpush1.msra.mxu0 0.0
    %494 = vmatprep.subr.mxu0 0.0
    %495 = vmatpush1.msra.mxu0 0.0
    %496 = vmatprep.subr.mxu0 0.0
    %497 = vmatpush1.msra.mxu0 0.0
    %498 = vmatprep.subr.mxu0 0.0
    %499 = vmatpush1.msra.mxu0 0.0
    %500 = vmatprep.subr.mxu0 0.0
    %501 = vmatpush1.msra.mxu0 0.0
    %502 = vmatprep.subr.mxu0 0.0
    %503 = vmatpush1.msra.mxu0 0.0
    %504 = vmatprep.subr.mxu0 0.0
    %505 = vmatpush1.msra.mxu0 0.0
    %506 = vmatprep.subr.mxu0 0.0
    %507 = vmatpush1.msra.mxu0 0.0
    %508 = vmatprep.subr.mxu0 0.0
    %509 = vmatpush1.msra.mxu0 0.0
    %510 = vmatprep.subr.mxu0 0.0
    %511 = vmatpush1.msra.mxu0 0.0
    %512 = vmatprep.subr.mxu0 0.0
    %513 = vmatpush1.msra.mxu0 0.0
    %514 = vmatprep.subr.mxu0 0.0
    %515 = vmatpush1.msra.mxu0 0.0
    %516 = vmatprep.subr.mxu0 0.0
    %517 = vmatpush1.msra.mxu0 0.0
    %518 = vmatprep.subr.mxu0 0.0
    %519 = vmatpush1.msra.mxu0 0.0
    %520 = vmatprep.subr.mxu0 0.0
    %521 = vmatpush1.msra.mxu0 0.0
    %522 = vmatprep.subr.mxu0 0.0
    %523 = vmatpush1.msra.mxu0 0.0
    %524 = vmatprep.subr.mxu0 0.0
    %525 = vmatpush1.msra.mxu0 0.0
    %526 = vmatprep.subr.mxu0 0.0
    %527 = vmatpush1.msra.mxu0 0.0
    %528 = vmatprep.subr.mxu0 0.0
    %529 = vmatpush1.msra.mxu0 0.0
    %530 = vmatprep.subr.mxu0 0.0
    %531 = vmatpush1.msra.mxu0 0.0
    %532 = vmatprep.subr.mxu0 0.0
    %533 = vmatpush1.msra.mxu0 0.0
    %534 = vmatprep.subr.mxu0 0.0
    %535 = vmatpush1.msra.mxu0 0.0
    %536 = vmatprep.subr.mxu0 0.0
    %537 = vmatpush1.msra.mxu0 0.0
    %538 = vmatprep.subr.mxu0 0.0
    %539 = vmatpush1.msra.mxu0 0.0
    %540 = vmatprep.mubr.f32.mxu0 0.0
    %541 = vmatmul.mubr.f32.gmra.mrb[0].mxu0 %v474
    %v542 = vpop.f32.mrb[0].mxu0
    %v543 = vadd.f32 %v471, %v542
    %v544 = vpop.f32.mrb[0].mxu0
    %545 = vdwg.mxu0
    %v546 = vld [vmem:[#allocation7] sm:$0xff]
    %v547 = vld [vmem:[#allocation14] sm:$0xff]
    %v548 = vld [vmem:[#allocation14 + $0x8] sm:$0xff]
    %v549 = vld [vmem:[#allocation14 + $0x10] sm:$0xff]
    %v550 = vld [vmem:[#allocation14 + $0x18] sm:$0xff]
    %v552 = vsel %vm380, %v546, 0
    %554 = vmatprep.subr.mxu0 0.0
    %555 = vmatpush1.msra.mxu0 %v547
    %556 = vmatprep.subr.mxu0 0.0
    %557 = vmatpush1.msra.mxu0 %v548
    %558 = vmatprep.subr.mxu0 0.0
    %559 = vmatpush1.msra.mxu0 %v549
    %560 = vmatprep.subr.mxu0 0.0
    %561 = vmatpush1.msra.mxu0 %v550
    %562 = vmatprep.subr.mxu0 0.0
    %563 = vmatpush1.msra.mxu0 0.0
    %564 = vmatprep.subr.mxu0 0.0
    %565 = vmatpush1.msra.mxu0 0.0
    %566 = vmatprep.subr.mxu0 0.0
    %567 = vmatpush1.msra.mxu0 0.0
    %568 = vmatprep.subr.mxu0 0.0
    %569 = vmatpush1.msra.mxu0 0.0
    %570 = vmatprep.subr.mxu0 0.0
    %571 = vmatpush1.msra.mxu0 0.0
    %572 = vmatprep.subr.mxu0 0.0
    %573 = vmatpush1.msra.mxu0 0.0
    %574 = vmatprep.subr.mxu0 0.0
    %575 = vmatpush1.msra.mxu0 0.0
    %576 = vmatprep.subr.mxu0 0.0
    %577 = vmatpush1.msra.mxu0 0.0
    %578 = vmatprep.subr.mxu0 0.0
    %579 = vmatpush1.msra.mxu0 0.0
    %580 = vmatprep.subr.mxu0 0.0
    %581 = vmatpush1.msra.mxu0 0.0
    %582 = vmatprep.subr.mxu0 0.0
    %583 = vmatpush1.msra.mxu0 0.0
    %584 = vmatprep.subr.mxu0 0.0
    %585 = vmatpush1.msra.mxu0 0.0
    %586 = vmatprep.subr.mxu0 0.0
    %587 = vmatpush1.msra.mxu0 0.0
    %588 = vmatprep.subr.mxu0 0.0
    %589 = vmatpush1.msra.mxu0 0.0
    %590 = vmatprep.subr.mxu0 0.0
    %591 = vmatpush1.msra.mxu0 0.0
    %592 = vmatprep.subr.mxu0 0.0
    %593 = vmatpush1.msra.mxu0 0.0
    %594 = vmatprep.subr.mxu0 0.0
    %595 = vmatpush1.msra.mxu0 0.0
    %596 = vmatprep.subr.mxu0 0.0
    %597 = vmatpush1.msra.mxu0 0.0
    %598 = vmatprep.subr.mxu0 0.0
    %599 = vmatpush1.msra.mxu0 0.0
    %600 = vmatprep.subr.mxu0 0.0
    %601 = vmatpush1.msra.mxu0 0.0
    %602 = vmatprep.subr.mxu0 0.0
    %603 = vmatpush1.msra.mxu0 0.0
    %604 = vmatprep.subr.mxu0 0.0
    %605 = vmatpush1.msra.mxu0 0.0
    %606 = vmatprep.subr.mxu0 0.0
    %607 = vmatpush1.msra.mxu0 0.0
    %608 = vmatprep.subr.mxu0 0.0
    %609 = vmatpush1.msra.mxu0 0.0
    %610 = vmatprep.subr.mxu0 0.0
    %611 = vmatpush1.msra.mxu0 0.0
    %612 = vmatprep.subr.mxu0 0.0
    %613 = vmatpush1.msra.mxu0 0.0
    %614 = vmatprep.subr.mxu0 0.0
    %615 = vmatpush1.msra.mxu0 0.0
    %616 = vmatprep.subr.mxu0 0.0
    %617 = vmatpush1.msra.mxu0 0.0
    %618 = vmatprep.mubr.f32.mxu0 0.0
    %619 = vmatmul.mubr.f32.gmra.mrb[0].mxu0 %v552
    %v620 = vpop.f32.mrb[0].mxu0
    %v621 = vadd.f32 0.0, %v620
    %v622 = vpop.f32.mrb[0].mxu0
    %623 = vdwg.mxu0
    %v626 = vunpack.c.l.s4 1966171168
    %v627 = vunpack.c.0.s8 %v626
    %v628 = vlaneseq
    %v629 = vshrl.u32 %v628, 7
    %v630 = vsub.s32 %v627, %v629
    %v631 = vrot.slane %v543, %v630
    %v632 = vcombine.high %v631, %v631
    %v634 = vunpack.c.l.s4 1966171168
    %v635 = vunpack.c.0.s8 %v634
    %v636 = vlaneseq
    %v637 = vshrl.u32 %v636, 7
    %v638 = vsub.s32 %v635, %v637
    %v639 = vrot.slane %v631, %v638
    %v641 = vunpack.c.l.s4 1966171168
    %v642 = vunpack.c.0.s8 %v641
    %v643 = vlaneseq
    %v644 = vshrl.u32 %v643, 7
    %v645 = vsub.s32 %v642, %v644
    %v646 = vrot.slane %v632, %v645
    %v647 = vlaneseq
    %v648 = vshrl.u32 %v647, 7
    %v649 = vsub.s32 0, %v648
    %v650 = vrot.slane %v639, %v649
    %v651 = vlaneseq
    %v652 = vshrl.u32 %v651, 7
    %v653 = vsub.s32 0, %v652
    %v654 = vrot.slane %v646, %v653
    %v657 = vadd.f32 %v454, %v650
    %v658 = vadd.f32 %v459, %v654
    %v659 = vadd.f32 %v657, %v621
    %v660 = vadd.f32 %v658, %v621
    %661 = vst.msk [vmem:[#allocation16] sm:$0xff] %vm380, %v659
    %662 = vst.msk [vmem:[#allocation16 + $0x8] sm:$0xff] %vm380, %v660
    // Predicated region
    $region82: #{tpu_custom_call.1} parent=1 // pred_check
      _
    $region83: #{tpu_custom_call.1} parent=1 // pred_check_branch
      %664 = sbr.rel (0) target = $region85
    $region84: #{tpu_custom_call.1} parent=1 // pred_region
      %s666 = ssub.s32 256, 256
      %667 = vsyncadd [#allocation4], %s666
      %s668 = sshll.u32 [#allocation16], 4
      %s669 = int_to_ptr.vmem [resolvable:$true] %s668
      %674 = dma.vmem_to_hbm [thread:$0]  %s669, 256, %s12, [#allocation4], 128, 128, 8
    $region85: #{tpu_custom_call.1} parent=1 // pred_fallthru
      _
    // Predicated region
    $region86: #{tpu_custom_call.1} parent=1 // pred_check
      _
    $region87: #{tpu_custom_call.1} parent=1 // pred_check_branch
      %676 = sbr.rel (0) target = $region89
    $region88: #{tpu_custom_call.1} parent=1 // pred_region
      %677 = dma.done [#allocation4], 256
    $region89: #{tpu_custom_call.1} parent=1 // pred_fallthru
      _
    %678 = vsyncpa [#allocation3], 1
    %679 = vsyncpa [#allocation6], 1
    %680 = vsyncpa [#allocation9], 1
    %681 = vsyncpa [#allocation12], 1
    %682 = vsyncpa [#allocation15], 1
    %683 = vsyncpa [#allocation4], 1

</llo_original>
